<compile_context>
chip_gen: v7x
topology: tpu7x:2x2x1
jax: 0.10.0
libtpu: 0.0.40
codegen_flags: <defaults>
</compile_context>

<pallas_src>
import functools
import math

import jax
import jax.numpy as jnp
from jax.experimental import pallas as pl
from jax.experimental.pallas import tpu as pltpu

_MiB = 1024 * 1024


def _round_up(x, m):
    return (x + m - 1) // m * m


def _vmem_capacity_bytes():
    # Per-core VMEM capacity; fall back to 64 MiB (v7x per-TC) when unknown.
    try:
        cap = int(pltpu.get_tpu_info().vmem_capacity_bytes)
        if cap > 0:
            return cap
    except Exception:
        pass
    return 64 * _MiB


def _vmem_need_bytes(tb, tn, in_pad, pieces):
    """Double-buffered pipeline tiles + in-kernel intermediates (no double count)."""
    wide = pieces * tn
    x_tiles = 2 * tb * in_pad * 4              # f32 x tile, double buffered
    w_tiles = 2 * in_pad * wide * 2            # bf16 weight tile, double buffered
    b_tiles = 2 * wide * 4                     # f32 bias tile, double buffered
    o_tiles = 2 * tb * tn * 4                  # f32 out tile, double buffered
    scratch = tb * in_pad * 2 + tb * wide * 4 + tb * tn * 4  # bf16 x + f32 res/acc
    return x_tiles + w_tiles + b_tiles + o_tiles + scratch


def _plan_out_tile(out_pad, in_pad, pieces, cap_bytes, tb_for_plan=256):
    """Largest multiple-of-128 divisor of out_pad whose tiles fit cap_bytes."""
    units = out_pad // 128
    divisors = sorted({d for d in range(1, units + 1) if units % d == 0},
                      reverse=True)
    for d in divisors:
        tn = d * 128
        if _vmem_need_bytes(tb_for_plan, tn, in_pad, pieces) <= cap_bytes:
            return tn
    # TODO(synk): add a K (in_features) grid axis for layers whose reduction
    # dimension alone exceeds the VMEM budget; not needed for typical Maxout sizes.
    return 128


def _plan_batch_tile(B, tn, in_pad, pieces, cap_bytes):
    """Batch tile: multiple of 8, <= 256, >= 2 tiles when B > 8 (megacore),
    minimal padding, shrunk until the VMEM budget fits."""
    if B <= 8:
        tb = 8
    else:
        max_tb = min(256, _round_up(-(-B // 2), 8))   # guarantee >= 2 tiles
        best = (None, 8)
        t = 8
        while t <= max_tb:
            cost = (_round_up(B, t), -t)              # min padded rows, then max tile
            if best[0] is None or cost < best[0]:
                best = (cost, t)
            t += 8
        tb = best[1]
    while tb > 8 and _vmem_need_bytes(tb, tn, in_pad, pieces) > cap_bytes:
        tb = max(8, (tb // 2) // 8 * 8)
    return tb


def _maxout_kernel(x_ref, w_ref, b_ref, o_ref, *, pieces, tn):
    # x_ref: (TB, IN_PAD) f32        (pipelined batch tile)
    # w_ref: (1, IN_PAD, P*TN) bf16  (pieces fused along lanes)
    # b_ref: (1, 1, P*TN) f32
    # o_ref: (TB, TN) f32            (pipelined output tile)
    x = x_ref[...].astype(jnp.bfloat16)     # cast in-kernel; saves a wrapper HBM pass
    # One wide MXU pass covering all pieces, f32 accumulation, then bias.
    res = jnp.dot(x, w_ref[0], preferred_element_type=jnp.float32) + b_ref[0]
    acc = res[:, 0:tn]
    for p in range(1, pieces):              # pieces is small & static -> unrolled
        acc = jnp.maximum(acc, res[:, p * tn:(p + 1) * tn])
    o_ref[...] = acc.astype(o_ref.dtype)


def pack_maxout_params(weight, bias=None, *, vmem_capacity=None):
    """Repack Maxout parameters ONCE (hoisted out of the per-call path).

    weight: [pieces, out_features, in_features]   (PyTorch layout)
    bias:   [pieces, out_features] or None
    Returns (w_packed, b_packed, meta):
      w_packed: (n_j, in_pad, pieces*tn) bf16 -- pieces concatenated along lanes
      b_packed: (n_j, 1, pieces*tn)      f32
    """
    P, out_f, in_f = weight.shape
    in_pad = _round_up(in_f, 128)
    out_pad = _round_up(out_f, 128)

    capacity = vmem_capacity if vmem_capacity is not None else _vmem_capacity_bytes()
    cap_bytes = int(capacity * 0.85)          # headroom for compiler-managed scratch
    tn = _plan_out_tile(out_pad, in_pad, P, cap_bytes)
    n_j = out_pad // tn

    # [P, out, in] -> [P, in, out], bf16, zero-pad (exact in the dot products).
    w = jnp.transpose(weight, (0, 2, 1)).astype(jnp.bfloat16)
    w = jnp.pad(w, ((0, 0), (0, in_pad - in_f), (0, out_pad - out_f)))
    # (P, in_pad, n_j, tn) -> (n_j, in_pad, P, tn) -> (n_j, in_pad, P*tn)
    w_packed = (w.reshape(P, in_pad, n_j, tn)
                 .transpose(2, 1, 0, 3)
                 .reshape(n_j, in_pad, P * tn))

    if bias is None:
        b = jnp.zeros((P, out_pad), jnp.float32)
    else:
        b = jnp.pad(bias.astype(jnp.float32), ((0, 0), (0, out_pad - out_f)))
    b_packed = (b.reshape(P, n_j, tn)
                 .transpose(1, 0, 2)
                 .reshape(n_j, 1, P * tn))

    meta = dict(pieces=P, in_features=in_f, out_features=out_f,
                in_pad=in_pad, out_pad=out_pad, tn=tn, vmem_capacity=capacity)
    return w_packed, b_packed, meta


def maxout_packed(x, w_packed, b_packed, *, pieces, in_features, out_features,
                  in_pad, out_pad, tn, vmem_capacity):
    """Apply Maxout: x [B, in_features] f32 -> [B, out_features] f32."""
    B, in_f = x.shape
    assert in_f == in_features, "in_features mismatch"
    P = pieces
    n_j = out_pad // tn

    cap_bytes = int(vmem_capacity * 0.85)
    tb = _plan_batch_tile(B, tn, in_pad, P, cap_bytes)
    b_pad = _round_up(B, tb)
    n_i = b_pad // tb

    xp = x.astype(jnp.float32)
    if b_pad != B or in_pad != in_f:
        xp = jnp.pad(xp, ((0, b_pad - B), (0, in_pad - in_f)))

    need = _vmem_need_bytes(tb, tn, in_pad, P)
    vmem_limit = min(int(vmem_capacity),
                     max(32 * _MiB, need + need // 4 + 4 * _MiB))

    kernel = functools.partial(_maxout_kernel, pieces=P, tn=tn)

    # Hold the LARGER operand constant on the inner (fastest) grid axis so it is
    # fetched from HBM only once; the smaller operand streams.
    w_bytes = n_j * in_pad * P * tn * 2
    x_bytes = b_pad * in_pad * 4
    if w_bytes >= x_bytes:
        grid = (n_j, n_i)   # j outer, i inner: weight tile constant on inner axis
        x_spec = pl.BlockSpec((tb, in_pad), lambda j, i: (i, 0))
        w_spec = pl.BlockSpec((1, in_pad, P * tn), lambda j, i: (j, 0, 0))
        b_spec = pl.BlockSpec((1, 1, P * tn), lambda j, i: (j, 0, 0))
        o_spec = pl.BlockSpec((tb, tn), lambda j, i: (i, j))
    else:
        grid = (n_i, n_j)   # i outer, j inner: x tile constant on inner axis
        x_spec = pl.BlockSpec((tb, in_pad), lambda i, j: (i, 0))
        w_spec = pl.BlockSpec((1, in_pad, P * tn), lambda i, j: (j, 0, 0))
        b_spec = pl.BlockSpec((1, 1, P * tn), lambda i, j: (j, 0, 0))
        o_spec = pl.BlockSpec((tb, tn), lambda i, j: (i, j))

    out = pl.pallas_call(
        kernel,
        out_shape=jax.ShapeDtypeStruct((b_pad, out_pad), jnp.float32),
        grid=grid,
        in_specs=[x_spec, w_spec, b_spec],
        out_specs=o_spec,
        compiler_params=pltpu.CompilerParams(
            dimension_semantics=("parallel", "parallel"),
            vmem_limit_bytes=vmem_limit,
        ),
    )(xp, w_packed, b_packed)

    if b_pad != B or out_pad != out_features:
        out = out[:B, :out_features]
    return out


def maxout(x, weight, bias=None):
    """Convenience wrapper: pack + apply.  Prefer pack_maxout_params once per
    layer + maxout_packed per step (packing constant-folds under jit only when
    weight/bias are compile-time constants)."""
    w_packed, b_packed, meta = pack_maxout_params(weight, bias)
    return maxout_packed(x, w_packed, b_packed, **meta)


if __name__ == "__main__":
    key = jax.random.PRNGKey(0)
    batch, in_features, out_features, pieces = 2, 32, 16, 4

    k_x, k_w, k_b = jax.random.split(key, 3)
    bound = 1.0 / math.sqrt(in_features)
    x = jax.random.normal(k_x, (batch, in_features), jnp.float32)
    weight = jax.random.uniform(k_w, (pieces, out_features, in_features),
                                jnp.float32, -bound, bound)
    bias = jax.random.uniform(k_b, (pieces, out_features), jnp.float32,
                              -bound, bound)

    # Pack once (per perf review), then apply.
    w_packed, b_packed, meta = pack_maxout_params(weight, bias)
    out = jax.block_until_ready(maxout_packed(x, w_packed, b_packed, **meta))
    assert out.shape == (batch, out_features)

    # Reference 1: identical arithmetic (bf16 operands, f32 accumulate) — tight.
    xb = x.astype(jnp.bfloat16)
    wb = jnp.transpose(weight, (0, 2, 1)).astype(jnp.bfloat16)
    ref_bf16 = jnp.max(
        jnp.stack([jnp.dot(xb, wb[p], preferred_element_type=jnp.float32)
                   + bias[p] for p in range(pieces)]),
        axis=0)
    assert jnp.allclose(out, ref_bf16, atol=1e-3), "mismatch vs bf16 reference"

    # Reference 2: PyTorch-equivalent f32 math — loose (bf16 operand rounding).
    ref_f32 = jnp.max(jnp.einsum("bi,poi->pbo", x, weight) + bias[:, None, :],
                      axis=0)
    assert jnp.allclose(out, ref_f32, atol=3e-2), "mismatch vs f32 reference"

    # Larger, unaligned case exercising multi-tile grid, padding and slicing.
    B2, IN2, OUT2, P2 = 272, 200, 384, 3
    kx2, kw2, kb2 = jax.random.split(jax.random.PRNGKey(1), 3)
    x2 = jax.random.normal(kx2, (B2, IN2), jnp.float32)
    w2 = jax.random.normal(kw2, (P2, OUT2, IN2), jnp.float32) * 0.05
    b2 = jax.random.normal(kb2, (P2, OUT2), jnp.float32) * 0.05
    out2 = jax.block_until_ready(maxout(x2, w2, b2))
    assert out2.shape == (B2, OUT2)
    xb2 = x2.astype(jnp.bfloat16)
    wb2 = jnp.transpose(w2, (0, 2, 1)).astype(jnp.bfloat16)
    ref2 = jnp.max(
        jnp.stack([jnp.dot(xb2, wb2[p], preferred_element_type=jnp.float32) + b2[p]
                   for p in range(P2)]),
        axis=0)
    assert jnp.allclose(out2, ref2, atol=2e-3, rtol=1e-3), "mismatch on large case"

    print("KERNEL_OK")
</pallas_src>

<mosaic_0001>
module attributes {stable_mosaic.version = 11 : i64} {
  func.func @_maxout_kernel(%arg0: i32, %arg1: i32, %arg2: memref<8x128xf32, #tpu.memory_space<vmem>>, %arg3: memref<1x128x512xbf16, #tpu.memory_space<vmem>>, %arg4: memref<1x1x512xf32, #tpu.memory_space<vmem>>, %arg5: memref<8x128xf32, #tpu.memory_space<vmem>>) attributes {dimension_semantics = [#tpu.dimension_semantics<parallel>, #tpu.dimension_semantics<parallel>], iteration_bounds = array<i64: 1, 1>, scalar_prefetch = 0 : i64, scratch_operands = 0 : i64, tpu.core_type = #tpu.core_type<tc>, window_params = [{transform_indices = @transform_0, window_bounds = array<i64: 8, 128>}, {transform_indices = @transform_1, window_bounds = array<i64: 1, 128, 512>}, {transform_indices = @transform_2, window_bounds = array<i64: 1, 1, 512>}, {transform_indices = @transform_3, window_bounds = array<i64: 8, 128>}]} {
    %c0 = arith.constant 0 : index
    %c0_0 = arith.constant 0 : index
    %0 = vector.load %arg2[%c0, %c0_0] : memref<8x128xf32, #tpu.memory_space<vmem>>, vector<8x128xf32>
    %1 = arith.truncf %0 : vector<8x128xf32> to vector<8x128xbf16>
    %c0_1 = arith.constant 0 : index
    %c0_2 = arith.constant 0 : index
    %c0_3 = arith.constant 0 : index
    %2 = vector.load %arg3[%c0_1, %c0_2, %c0_3] : memref<1x128x512xbf16, #tpu.memory_space<vmem>>, vector<1x128x512xbf16>
    %3 = vector.shape_cast %2 : vector<1x128x512xbf16> to vector<128x512xbf16>
    %cst = arith.constant dense<0.000000e+00> : vector<8x512xf32>
    %4 = tpu.matmul %1, %3, %cst {dimension_numbers = #tpu.dot_dimension_numbers<[1], [0], [0], [1], [0, 0, 1, 1], [], []>} : vector<8x128xbf16>, vector<128x512xbf16>, vector<8x512xf32> -> vector<8x512xf32>
    %c0_4 = arith.constant 0 : index
    %c0_5 = arith.constant 0 : index
    %c0_6 = arith.constant 0 : index
    %5 = vector.load %arg4[%c0_4, %c0_5, %c0_6] : memref<1x1x512xf32, #tpu.memory_space<vmem>>, vector<1x1x512xf32>
    %6 = vector.shape_cast %5 : vector<1x1x512xf32> to vector<1x512xf32>
    %7 = vector.broadcast %6 : vector<1x512xf32> to vector<8x512xf32>
    %8 = arith.addf %4, %7 : vector<8x512xf32>
    %9 = vector.extract_strided_slice %8 {offsets = [0, 0], sizes = [8, 128], strides = [1, 1]} : vector<8x512xf32> to vector<8x128xf32>
    %10 = vector.extract_strided_slice %8 {offsets = [0, 128], sizes = [8, 128], strides = [1, 1]} : vector<8x512xf32> to vector<8x128xf32>
    %11 = arith.maximumf %9, %10 : vector<8x128xf32>
    %12 = vector.extract_strided_slice %8 {offsets = [0, 256], sizes = [8, 128], strides = [1, 1]} : vector<8x512xf32> to vector<8x128xf32>
    %13 = arith.maximumf %11, %12 : vector<8x128xf32>
    %14 = vector.extract_strided_slice %8 {offsets = [0, 384], sizes = [8, 128], strides = [1, 1]} : vector<8x512xf32> to vector<8x128xf32>
    %15 = arith.maximumf %13, %14 : vector<8x128xf32>
    %c0_7 = arith.constant 0 : index
    %c0_8 = arith.constant 0 : index
    %16 = vector.load %arg5[%c0_7, %c0_8] : memref<8x128xf32, #tpu.memory_space<vmem>>, vector<8x128xf32>
    tpu.vector_store %arg5[%c0_7, %c0_8], %15 {strides = array<i32>} : memref<8x128xf32, #tpu.memory_space<vmem>>, vector<8x128xf32>,
    return
  }
  func.func @transform_0(%arg0: i32, %arg1: i32) -> (i32, i32) {
    %c0_i32 = arith.constant 0 : i32
    %c0_i32_0 = arith.constant 0 : i32
    return %arg1, %c0_i32 : i32, i32
  }
  func.func @transform_1(%arg0: i32, %arg1: i32) -> (i32, i32, i32) {
    %c0_i32 = arith.constant 0 : i32
    %c0_i32_0 = arith.constant 0 : i32
    %c0_i32_1 = arith.constant 0 : i32
    return %arg0, %c0_i32, %c0_i32_0 : i32, i32, i32
  }
  func.func @transform_2(%arg0: i32, %arg1: i32) -> (i32, i32, i32) {
    %c0_i32 = arith.constant 0 : i32
    %c0_i32_0 = arith.constant 0 : i32
    %c0_i32_1 = arith.constant 0 : i32
    return %arg0, %c0_i32, %c0_i32_0 : i32, i32, i32
  }
  func.func @transform_3(%arg0: i32, %arg1: i32) -> (i32, i32) {
    %c0_i32 = arith.constant 0 : i32
    return %arg1, %arg0 : i32, i32
  }
}

</mosaic_0001>

<llo_original>
// kernel: tpu_custom_call.1
$region0: #{tpu_custom_call.1}
  #allocation0 [shape = 'u32[]', space=smem, size = 0x4, offset = 0x4, fixed_abs, tag = 'smem constant byte address 0x4 - core index']
  #allocation1 [shape = 'u32[144,128]{1,0:T(1,128)}', space=vmem, size = 0x12000, scoped, tag = 'internal scratch']
  %s0 = inlined_call_operand.hbm [shape: f32[8,128], index: 0, kind: input, shape index: {}]
  %s1 = inlined_call_operand.hbm [shape: bf16[1,128,512], index: 1, kind: input, shape index: {}]
  %s2 = inlined_call_operand.vmem [shape: f32[1,1,512], index: 2, kind: input, shape index: {}]
  %s3 = inlined_call_operand.hbm [shape: f32[8,128], index: 3, kind: output, shape index: {}]
  %s4 = sld [smem:[#allocation0]]
  $region30: #{tpu_custom_call.1} parent=0
    _
  %s6 = ssub.s32 1, %s4
  %s7 = scalar_select 0, %s6, %s4
  $region1: #{tpu_custom_call.1} parent=0
    #allocation2 [shape = 'u8[4096]{0}', space=vmem, size = 0x1000, scoped, tag = 'input window, operand 0, single buffered']
    #allocation3 [shape = 's32[1]{0}', space=sflag, size = 0x4, scoped, tag = 'scoped memory for tpu_custom_call.1']
    #allocation4 [shape = 's32[1]{0}', space=sflag, size = 0x4, scoped, tag = 'scoped memory for tpu_custom_call.1']
    #allocation5 [shape = 'u8[131072]{0}', space=vmem, size = 0x20000, scoped, tag = 'input window, operand 1, single buffered']
    #allocation6 [shape = 's32[1]{0}', space=sflag, size = 0x4, scoped, tag = 'scoped memory for tpu_custom_call.1']
    #allocation7 [shape = 'u8[4096]{0}', space=vmem, size = 0x1000, scoped, tag = 'output window, operand 0, single buffered']
    %8 = vsyncpa [#allocation3], 0
    %9 = vsyncpa [#allocation6], 0
    %10 = vsyncpa [#allocation4], 0
    // Predicated region
    $region2: #{tpu_custom_call.1} parent=1 // pred_check
      _
    $region3: #{tpu_custom_call.1} parent=1 // pred_check_branch
      %12 = sbr.rel (0) target = $region5
    $region4: #{tpu_custom_call.1} parent=1 // pred_region
      %s14 = ssub.s32 128, 128
      %15 = vsyncadd [#allocation3], %s14
      %s17 = sshll.u32 [#allocation2], 4
      %s18 = int_to_ptr.vmem [resolvable:$true] %s17
      %20 = dma.hbm_to_vmem [thread:$0]  %s0, 128, %s18, [#allocation3]
    $region5: #{tpu_custom_call.1} parent=1 // pred_fallthru
      _
    // Predicated region
    $region6: #{tpu_custom_call.1} parent=1 // pred_check
      _
    $region7: #{tpu_custom_call.1} parent=1 // pred_check_branch
      %22 = sbr.rel (0) target = $region9
    $region8: #{tpu_custom_call.1} parent=1 // pred_region
      %s24 = ssub.s32 4096, 4096
      %25 = vsyncadd [#allocation6], %s24
      %s26 = sshll.u32 [#allocation5], 4
      %s27 = int_to_ptr.vmem [resolvable:$true] %s26
      %32 = dma.hbm_to_vmem [thread:$0]  %s1, 4096, %s27, [#allocation6], 256, 256, 16
    $region9: #{tpu_custom_call.1} parent=1 // pred_fallthru
      _
    // Predicated region
    $region10: #{tpu_custom_call.1} parent=1 // pred_check
      _
    $region11: #{tpu_custom_call.1} parent=1 // pred_check_branch
      %34 = sbr.rel (0) target = $region13
    $region12: #{tpu_custom_call.1} parent=1 // pred_region
      _
    $region13: #{tpu_custom_call.1} parent=1 // pred_fallthru
      _
    // Predicated region
    $region14: #{tpu_custom_call.1} parent=1 // pred_check
      _
    $region15: #{tpu_custom_call.1} parent=1 // pred_check_branch
      %36 = sbr.rel (0) target = $region17
    $region16: #{tpu_custom_call.1} parent=1 // pred_region
      %37 = dma.done [#allocation3], 128
    $region17: #{tpu_custom_call.1} parent=1 // pred_fallthru
      _
    // Predicated region
    $region18: #{tpu_custom_call.1} parent=1 // pred_check
      _
    $region19: #{tpu_custom_call.1} parent=1 // pred_check_branch
      %39 = sbr.rel (0) target = $region21
    $region20: #{tpu_custom_call.1} parent=1 // pred_region
      %40 = dma.done [#allocation6], 4096
    $region21: #{tpu_custom_call.1} parent=1 // pred_fallthru
      _
    %v42 = vld [vmem:[#allocation2] sm:$0xff]
    %v43 = vpack.c.bf16 %v42, %v42
    %v44 = vld [vmem:[#allocation5] sm:$0xff]
    %v45 = vld [vmem:[#allocation5 + $0x8] sm:$0xff]
    %v46 = vld [vmem:[#allocation5 + $0x10] sm:$0xff]
    %v47 = vld [vmem:[#allocation5 + $0x18] sm:$0xff]
    %v48 = vld [vmem:[#allocation5 + $0x20] sm:$0xff]
    %v49 = vld [vmem:[#allocation5 + $0x28] sm:$0xff]
    %v50 = vld [vmem:[#allocation5 + $0x30] sm:$0xff]
    %v51 = vld [vmem:[#allocation5 + $0x38] sm:$0xff]
    %v52 = vld [vmem:[#allocation5 + $0x40] sm:$0xff]
    %v53 = vld [vmem:[#allocation5 + $0x48] sm:$0xff]
    %v54 = vld [vmem:[#allocation5 + $0x50] sm:$0xff]
    %v55 = vld [vmem:[#allocation5 + $0x58] sm:$0xff]
    %v56 = vld [vmem:[#allocation5 + $0x60] sm:$0xff]
    %v57 = vld [vmem:[#allocation5 + $0x68] sm:$0xff]
    %v58 = vld [vmem:[#allocation5 + $0x70] sm:$0xff]
    %v59 = vld [vmem:[#allocation5 + $0x78] sm:$0xff]
    %v60 = vld [vmem:[#allocation5 + $0x80] sm:$0xff]
    %v61 = vld [vmem:[#allocation5 + $0x88] sm:$0xff]
    %v62 = vld [vmem:[#allocation5 + $0x90] sm:$0xff]
    %v63 = vld [vmem:[#allocation5 + $0x98] sm:$0xff]
    %v64 = vld [vmem:[#allocation5 + $0xa0] sm:$0xff]
    %v65 = vld [vmem:[#allocation5 + $0xa8] sm:$0xff]
    %v66 = vld [vmem:[#allocation5 + $0xb0] sm:$0xff]
    %v67 = vld [vmem:[#allocation5 + $0xb8] sm:$0xff]
    %v68 = vld [vmem:[#allocation5 + $0xc0] sm:$0xff]
    %v69 = vld [vmem:[#allocation5 + $0xc8] sm:$0xff]
    %v70 = vld [vmem:[#allocation5 + $0xd0] sm:$0xff]
    %v71 = vld [vmem:[#allocation5 + $0xd8] sm:$0xff]
    %v72 = vld [vmem:[#allocation5 + $0xe0] sm:$0xff]
    %v73 = vld [vmem:[#allocation5 + $0xe8] sm:$0xff]
    %v74 = vld [vmem:[#allocation5 + $0xf0] sm:$0xff]
    %v75 = vld [vmem:[#allocation5 + $0xf8] sm:$0xff]
    %v76 = vld [vmem:[%s2] sm:$0xf]
    %v78 = vlaneseq
    %v79 = vshrl.u32 %v78, 7
    %v80 = vsub.s32 0, %v79
    %v81 = vrot.slane %v76, %v80
    %v82 = vlaneseq
    %v83 = vshrl.u32 %v82, 7
    %v84 = vsub.s32 1, %v83
    %v85 = vrot.slane %v76, %v84
    %v86 = vlaneseq
    %v87 = vshrl.u32 %v86, 7
    %v88 = vsub.s32 2, %v87
    %v89 = vrot.slane %v76, %v88
    %v90 = vlaneseq
    %v91 = vshrl.u32 %v90, 7
    %v92 = vsub.s32 3, %v91
    %v93 = vrot.slane %v76, %v92
    %v130 = vunpack.c.l.b16 %v44
    %v131 = vunpack.c.h.b16 %v44
    %v132 = vunpack.c.l.b16 %v45
    %v133 = vunpack.c.h.b16 %v45
    %v134 = vunpack.c.l.b16 %v46
    %v135 = vunpack.c.h.b16 %v46
    %v136 = vunpack.c.l.b16 %v47
    %v137 = vunpack.c.h.b16 %v47
    %v138 = vunpack.c.l.b16 %v48
    %v139 = vunpack.c.h.b16 %v48
    %v140 = vunpack.c.l.b16 %v49
    %v141 = vunpack.c.h.b16 %v49
    %v142 = vunpack.c.l.b16 %v50
    %v143 = vunpack.c.h.b16 %v50
    %v144 = vunpack.c.l.b16 %v51
    %v145 = vunpack.c.h.b16 %v51
    %v146 = vunpack.c.l.b16 %v52
    %v147 = vunpack.c.h.b16 %v52
    %v148 = vunpack.c.l.b16 %v53
    %v149 = vunpack.c.h.b16 %v53
    %v150 = vunpack.c.l.b16 %v54
    %v151 = vunpack.c.h.b16 %v54
    %v152 = vunpack.c.l.b16 %v55
    %v153 = vunpack.c.h.b16 %v55
    %v154 = vunpack.c.l.b16 %v56
    %v155 = vunpack.c.h.b16 %v56
    %v156 = vunpack.c.l.b16 %v57
    %v157 = vunpack.c.h.b16 %v57
    %v158 = vunpack.c.l.b16 %v58
    %v159 = vunpack.c.h.b16 %v58
    %v160 = vunpack.c.l.b16 %v59
    %v161 = vunpack.c.h.b16 %v59
    %v162 = vunpack.c.l.b16 %v60
    %v163 = vunpack.c.h.b16 %v60
    %v164 = vunpack.c.l.b16 %v61
    %v165 = vunpack.c.h.b16 %v61
    %v166 = vunpack.c.l.b16 %v62
    %v167 = vunpack.c.h.b16 %v62
    %v168 = vunpack.c.l.b16 %v63
    %v169 = vunpack.c.h.b16 %v63
    %v170 = vunpack.c.l.b16 %v64
    %v171 = vunpack.c.h.b16 %v64
    %v172 = vunpack.c.l.b16 %v65
    %v173 = vunpack.c.h.b16 %v65
    %v174 = vunpack.c.l.b16 %v66
    %v175 = vunpack.c.h.b16 %v66
    %v176 = vunpack.c.l.b16 %v67
    %v177 = vunpack.c.h.b16 %v67
    %v178 = vunpack.c.l.b16 %v68
    %v179 = vunpack.c.h.b16 %v68
    %v180 = vunpack.c.l.b16 %v69
    %v181 = vunpack.c.h.b16 %v69
    %v182 = vunpack.c.l.b16 %v70
    %v183 = vunpack.c.h.b16 %v70
    %v184 = vunpack.c.l.b16 %v71
    %v185 = vunpack.c.h.b16 %v71
    %v186 = vunpack.c.l.b16 %v72
    %v187 = vunpack.c.h.b16 %v72
    %v188 = vunpack.c.l.b16 %v73
    %v189 = vunpack.c.h.b16 %v73
    %v190 = vunpack.c.l.b16 %v74
    %v191 = vunpack.c.h.b16 %v74
    %v192 = vunpack.c.l.b16 %v75
    %v193 = vunpack.c.h.b16 %v75
    %v194 = vpack.c.b16 %v134, %v130
    %v195 = vpack.c.b16 %v135, %v131
    %v196 = vpack.c.b16 %v136, %v132
    %v197 = vpack.c.b16 %v137, %v133
    %v198 = vpack.c.b16 %v142, %v138
    %v199 = vpack.c.b16 %v143, %v139
    %v200 = vpack.c.b16 %v144, %v140
    %v201 = vpack.c.b16 %v145, %v141
    %v202 = vpack.c.b16 %v150, %v146
    %v203 = vpack.c.b16 %v151, %v147
    %v204 = vpack.c.b16 %v152, %v148
    %v205 = vpack.c.b16 %v153, %v149
    %v206 = vpack.c.b16 %v158, %v154
    %v207 = vpack.c.b16 %v159, %v155
    %v208 = vpack.c.b16 %v160, %v156
    %v209 = vpack.c.b16 %v161, %v157
    %v210 = vpack.c.b16 %v166, %v162
    %v211 = vpack.c.b16 %v167, %v163
    %v212 = vpack.c.b16 %v168, %v164
    %v213 = vpack.c.b16 %v169, %v165
    %v214 = vpack.c.b16 %v174, %v170
    %v215 = vpack.c.b16 %v175, %v171
    %v216 = vpack.c.b16 %v176, %v172
    %v217 = vpack.c.b16 %v177, %v173
    %v218 = vpack.c.b16 %v182, %v178
    %v219 = vpack.c.b16 %v183, %v179
    %v220 = vpack.c.b16 %v184, %v180
    %v221 = vpack.c.b16 %v185, %v181
    %v222 = vpack.c.b16 %v190, %v186
    %v223 = vpack.c.b16 %v191, %v187
    %v224 = vpack.c.b16 %v192, %v188
    %v225 = vpack.c.b16 %v193, %v189
    %258 = vmatprep.subr.bf16.mxu0 %v195
    %259 = vmatpush1.bf16.msra.mxu0 %v194
    %260 = vmatprep.subr.bf16.mxu0 %v199
    %261 = vmatpush1.bf16.msra.mxu0 %v198
    %262 = vmatprep.subr.bf16.mxu0 %v203
    %263 = vmatpush1.bf16.msra.mxu0 %v202
    %264 = vmatprep.subr.bf16.mxu0 %v207
    %265 = vmatpush1.bf16.msra.mxu0 %v206
    %266 = vmatprep.subr.bf16.mxu0 %v211
    %267 = vmatpush1.bf16.msra.mxu0 %v210
    %268 = vmatprep.subr.bf16.mxu0 %v215
    %269 = vmatpush1.bf16.msra.mxu0 %v214
    %270 = vmatprep.subr.bf16.mxu0 %v219
    %271 = vmatpush1.bf16.msra.mxu0 %v218
    %272 = vmatprep.subr.bf16.mxu0 %v223
    %273 = vmatpush1.bf16.msra.mxu0 %v222
    %274 = vmatprep.subr.bf16.mxu0 0
    %275 = vmatpush1.bf16.msra.mxu0 0
    %276 = vmatprep.subr.bf16.mxu0 0
    %277 = vmatpush1.bf16.msra.mxu0 0
    %278 = vmatprep.subr.bf16.mxu0 0
    %279 = vmatpush1.bf16.msra.mxu0 0
    %280 = vmatprep.subr.bf16.mxu0 0
    %281 = vmatpush1.bf16.msra.mxu0 0
    %282 = vmatprep.subr.bf16.mxu0 0
    %283 = vmatpush1.bf16.msra.mxu0 0
    %284 = vmatprep.subr.bf16.mxu0 0
    %285 = vmatpush1.bf16.msra.mxu0 0
    %286 = vmatprep.subr.bf16.mxu0 0
    %287 = vmatpush1.bf16.msra.mxu0 0
    %288 = vmatprep.subr.bf16.mxu0 0
    %289 = vmatpush1.bf16.msra.mxu0 0
    %290 = vmatprep.mubr.bf16.mxu0 0
    %291 = vmatmul.mubr.bf16.gmra.mrb[0].mxu0 %v43
    %v292 = vpop.f32.mrb[0].mxu0
    %v293 = vadd.f32 %v81, %v292
    %v294 = vpop.f32.mrb[0].mxu0
    %v295 = vadd.f32 %v85, %v294
    %v296 = vpop.f32.mrb[0].mxu0
    %v297 = vpop.f32.mrb[0].mxu0
    %298 = vdwg.mxu0
    %299 = vmatprep.subr.bf16.mxu0 %v197
    %300 = vmatpush1.bf16.msra.mxu0 %v196
    %301 = vmatprep.subr.bf16.mxu0 %v201
    %302 = vmatpush1.bf16.msra.mxu0 %v200
    %303 = vmatprep.subr.bf16.mxu0 %v205
    %304 = vmatpush1.bf16.msra.mxu0 %v204
    %305 = vmatprep.subr.bf16.mxu0 %v209
    %306 = vmatpush1.bf16.msra.mxu0 %v208
    %307 = vmatprep.subr.bf16.mxu0 %v213
    %308 = vmatpush1.bf16.msra.mxu0 %v212
    %309 = vmatprep.subr.bf16.mxu0 %v217
    %310 = vmatpush1.bf16.msra.mxu0 %v216
    %311 = vmatprep.subr.bf16.mxu0 %v221
    %312 = vmatpush1.bf16.msra.mxu0 %v220
    %313 = vmatprep.subr.bf16.mxu0 %v225
    %314 = vmatpush1.bf16.msra.mxu0 %v224
    %315 = vmatprep.subr.bf16.mxu0 0
    %316 = vmatpush1.bf16.msra.mxu0 0
    %317 = vmatprep.subr.bf16.mxu0 0
    %318 = vmatpush1.bf16.msra.mxu0 0
    %319 = vmatprep.subr.bf16.mxu0 0
    %320 = vmatpush1.bf16.msra.mxu0 0
    %321 = vmatprep.subr.bf16.mxu0 0
    %322 = vmatpush1.bf16.msra.mxu0 0
    %323 = vmatprep.subr.bf16.mxu0 0
    %324 = vmatpush1.bf16.msra.mxu0 0
    %325 = vmatprep.subr.bf16.mxu0 0
    %326 = vmatpush1.bf16.msra.mxu0 0
    %327 = vmatprep.subr.bf16.mxu0 0
    %328 = vmatpush1.bf16.msra.mxu0 0
    %329 = vmatprep.subr.bf16.mxu0 0
    %330 = vmatpush1.bf16.msra.mxu0 0
    %331 = vmatprep.mubr.bf16.mxu0 0
    %332 = vmatmul.mubr.bf16.gmra.mrb[0].mxu0 %v43
    %v333 = vpop.f32.mrb[0].mxu0
    %v334 = vadd.f32 %v89, %v333
    %v335 = vpop.f32.mrb[0].mxu0
    %v336 = vadd.f32 %v93, %v335
    %v337 = vpop.f32.mrb[0].mxu0
    %v338 = vpop.f32.mrb[0].mxu0
    %339 = vdwg.mxu0
    %v340 = vmax.f32 %v293, %v295
    %v341 = vmax.f32 %v340, %v334
    %v342 = vmax.f32 %v341, %v336
    %343 = vst [vmem:[#allocation7] sm:$0xff] %v342
    // Predicated region
    $region22: #{tpu_custom_call.1} parent=1 // pred_check
      _
    $region23: #{tpu_custom_call.1} parent=1 // pred_check_branch
      %345 = sbr.rel (0) target = $region25
    $region24: #{tpu_custom_call.1} parent=1 // pred_region
      %s347 = ssub.s32 128, 128
      %348 = vsyncadd [#allocation4], %s347
      %s350 = sshll.u32 [#allocation7], 4
      %s351 = int_to_ptr.vmem [resolvable:$true] %s350
      %353 = dma.vmem_to_hbm [thread:$0]  %s351, 128, %s3, [#allocation4]
    $region25: #{tpu_custom_call.1} parent=1 // pred_fallthru
      _
    // Predicated region
    $region26: #{tpu_custom_call.1} parent=1 // pred_check
      _
    $region27: #{tpu_custom_call.1} parent=1 // pred_check_branch
      %355 = sbr.rel (0) target = $region29
    $region28: #{tpu_custom_call.1} parent=1 // pred_region
      %356 = dma.done [#allocation4], 128
    $region29: #{tpu_custom_call.1} parent=1 // pred_fallthru
      _
    %357 = vsyncpa [#allocation3], 1
    %358 = vsyncpa [#allocation6], 1
    %359 = vsyncpa [#allocation4], 1

</llo_original>
